<compile_context>
chip_gen: v7x
topology: tpu7x:2x2x1
jax: 0.10.0
libtpu: 0.0.40
codegen_flags: <defaults>
</compile_context>

<pallas_src>
import jax
import jax.numpy as jnp
from jax.experimental import pallas as pl
from jax.experimental.pallas import tpu as pltpu


_SQRT_2_OVER_PI = 0.7978845608028654  # sqrt(2 / pi), hoisted constant


def _round_up(x, m):
    return ((x + m - 1) // m) * m


# --------------------------------------------------------------------------
# Kernel body: one (row-tile, hidden-tile) step of the fused MLP.
# grid = (Mp // tm, Hp // th); axis 0 parallel over row tiles, axis 1 is a
# reduction over hidden tiles accumulated into acc_ref (f32 VMEM scratch).
# --------------------------------------------------------------------------
def ffn_kernel(x_ref, w1_ref, b1_ref, w2_ref, b2_ref, o_ref, acc_ref):
    k = pl.program_id(1)

    @pl.when(k == 0)
    def _():
        acc_ref[...] = jnp.zeros_like(acc_ref)

    # First linear for this hidden tile: [tm, Dp] @ [Dp, th] + [1, th]
    h = jnp.dot(x_ref[...], w1_ref[...], preferred_element_type=jnp.float32)
    h = h + b1_ref[...].astype(jnp.float32)

    # tanh-approx GELU (matches the PyTorch reference formula exactly).
    c = jnp.float32(_SQRT_2_OVER_PI)
    g = 0.5 * h * (1.0 + jnp.tanh(c * (h + 0.044715 * (h * h * h))))

    # Second linear partial product: [tm, th] @ [th, Dp], accumulated in f32.
    acc_ref[...] += jnp.dot(g.astype(w2_ref.dtype), w2_ref[...],
                            preferred_element_type=jnp.float32)

    @pl.when(k == pl.num_programs(1) - 1)
    def _():
        o_ref[...] = (acc_ref[...] + b2_ref[...].astype(jnp.float32)
                      ).astype(o_ref.dtype)


# --------------------------------------------------------------------------
# Generation-aware tile selection.
# --------------------------------------------------------------------------
def _tpu_generation():
    try:
        kind = jax.devices()[0].device_kind.lower()
    except Exception:
        kind = ""
    for g in (7, 6, 5):
        if "v%d" % g in kind:
            return g
    return 0  # unknown -> conservative defaults


def _vmem_capacity_bytes(gen):
    try:
        info = pltpu.get_tpu_info()
        cap = int(getattr(info, "vmem_capacity_bytes", 0) or 0)
        if cap > 0:
            return cap
    except Exception:
        pass
    if gen >= 7:
        return 64 * 2**20
    if gen in (5, 6):
        return 128 * 2**20
    return 64 * 2**20


def _working_set_bytes(tm, th, Dp, itm):
    """Conservative VMEM estimate: every pipelined tile double-buffered."""
    return (2 * tm * Dp * itm          # x tile
            + 2 * Dp * th * itm        # w1 tile
            + 2 * th * Dp * itm        # w2 tile
            + 2 * tm * Dp * itm        # out tile
            + 2 * (th + Dp) * itm      # biases
            + tm * Dp * 4)             # f32 accumulator scratch


def _choose_tiles(M, D, H, itm):
    gen = _tpu_generation()
    vmem_cap = _vmem_capacity_bytes(gen)

    if gen >= 7:            # 64 MiB/TC; ~996 TF/s vs 3.2 TB/s -> tm ~384-512 suffices
        tm_cap, th_cap = 512, 512
        vmem_limit = min(vmem_cap, 56 * 2**20)
    elif gen == 6:          # 128 MiB; 918 TF/s vs 1.4 TB/s -> need big row tiles
        tm_cap, th_cap = 1024, 1024
        vmem_limit = min(vmem_cap, 104 * 2**20)
    elif gen == 5:          # 128 MiB; slower MXU -> 512 rows gives ample margin
        tm_cap, th_cap = 512, 1024
        vmem_limit = min(vmem_cap, 104 * 2**20)
    else:                   # unknown chip: conservative
        tm_cap, th_cap = 256, 512
        vmem_limit = min(vmem_cap, 48 * 2**20)

    budget = int(0.85 * vmem_limit)   # leave headroom for compiler scratch

    Dp = _round_up(D, 128)
    Hp = _round_up(H, 128)

    # Row tile: as large as the generation cap / problem allows; shrink if the
    # minimal (th=128) working set would not fit the VMEM budget.
    tm = min(tm_cap, _round_up(M, 8))
    while tm > 8 and _working_set_bytes(tm, 128, Dp, itm) > budget:
        tm = max(8, _round_up(tm // 2, 8))

    # Weight-resident fast path: th == Hp means the w1/w2 block indices never
    # change, so the weights are DMA'd exactly once for the whole grid.
    if _working_set_bytes(tm, Hp, Dp, itm) <= budget:
        th = Hp
    else:
        th = 128
        for cand in range(min(th_cap, Hp), 127, -128):
            # Only divisors of Hp: no over-padded (dead) k-steps.
            if Hp % cand == 0 and _working_set_bytes(tm, cand, Dp, itm) <= budget:
                th = cand
                break

    return tm, th, Dp, Hp, int(vmem_limit)


# --------------------------------------------------------------------------
# Wrapper.
# --------------------------------------------------------------------------
def feed_forward(x, w1, b1, w2, b2):
    """x: (B, S, D); w1: (D, H); b1: (H,); w2: (H, D); b2: (D,)  with H = 4*D."""
    B, S, D = x.shape
    H = w1.shape[1]
    M = B * S
    itm = jnp.dtype(x.dtype).itemsize

    tm, th, Dp, Hp, vmem_limit = _choose_tiles(M, D, H, itm)
    Mp = _round_up(M, tm)

    x_flat = x.reshape(M, D)

    # Pad only when needed (zero padding is exact for this MLP: padded hidden
    # columns give gelu(0)=0 and hit zero rows of w2).
    if (Mp, Dp) == (M, D):
        x_p = x_flat
    else:
        x_p = jnp.zeros((Mp, Dp), x.dtype).at[:M, :D].set(x_flat)
    if (Dp, Hp) == (D, H):
        w1_p = w1
    else:
        w1_p = jnp.zeros((Dp, Hp), w1.dtype).at[:D, :H].set(w1)
    if Hp == H:
        b1_p = b1.reshape(1, H)
    else:
        b1_p = jnp.zeros((1, Hp), b1.dtype).at[0, :H].set(b1)
    if (Hp, Dp) == (H, D):
        w2_p = w2
    else:
        w2_p = jnp.zeros((Hp, Dp), w2.dtype).at[:H, :D].set(w2)
    if Dp == D:
        b2_p = b2.reshape(1, D)
    else:
        b2_p = jnp.zeros((1, Dp), b2.dtype).at[0, :D].set(b2)

    grid = (Mp // tm, Hp // th)

    # Weights are re-fetched once per row tile only when the hidden axis is
    # actually tiled; in the resident path they are read exactly once.
    weight_passes = grid[0] if grid[1] > 1 else 1
    cost = pl.CostEstimate(
        flops=4 * Mp * Dp * Hp,
        transcendentals=Mp * Hp,
        bytes_accessed=(2 * Mp * Dp                    # x read + out write
                        + weight_passes * 2 * Dp * Hp  # w1 + w2 streams
                        + Hp + Dp) * itm,
    )

    out_p = pl.pallas_call(
        ffn_kernel,
        out_shape=jax.ShapeDtypeStruct((Mp, Dp), x.dtype),
        grid_spec=pltpu.PrefetchScalarGridSpec(
            num_scalar_prefetch=0,
            grid=grid,
            in_specs=[
                pl.BlockSpec((tm, Dp), lambda i, k: (i, 0)),   # x rows (resident over k)
                pl.BlockSpec((Dp, th), lambda i, k: (0, k)),   # w1 hidden tile
                pl.BlockSpec((1, th), lambda i, k: (0, k)),    # b1 hidden tile
                pl.BlockSpec((th, Dp), lambda i, k: (k, 0)),   # w2 hidden tile
                pl.BlockSpec((1, Dp), lambda i, k: (0, 0)),    # b2 (resident)
            ],
            out_specs=pl.BlockSpec((tm, Dp), lambda i, k: (i, 0)),
            scratch_shapes=[pltpu.VMEM((tm, Dp), jnp.float32)],
        ),
        compiler_params=pltpu.CompilerParams(
            dimension_semantics=("parallel", "arbitrary"),
            vmem_limit_bytes=vmem_limit,
        ),
        cost_estimate=cost,
    )(x_p, w1_p, b1_p, w2_p, b2_p)

    if (Mp, Dp) == (M, D):
        out = out_p
    else:
        out = out_p[:M, :D]
    return out.reshape(B, S, D)


def _reference(x, w1, b1, w2, b2):
    h = x @ w1 + b1
    c = jnp.sqrt(2.0 / jnp.pi)
    h = 0.5 * h * (1.0 + jnp.tanh(c * (h + 0.044715 * h ** 3)))
    return h @ w2 + b2


if __name__ == "__main__":
    B, S, D = 2, 8, 32
    H = 4 * D

    key = jax.random.PRNGKey(0)
    kx, kw1, kb1, kw2, kb2 = jax.random.split(key, 5)

    x = jax.random.normal(kx, (B, S, D), dtype=jnp.float32)
    # Deterministic init mirroring nn.Linear's uniform(-1/sqrt(fan_in), 1/sqrt(fan_in)).
    lim1 = 1.0 / jnp.sqrt(D)
    lim2 = 1.0 / jnp.sqrt(H)
    w1 = jax.random.uniform(kw1, (D, H), jnp.float32, -lim1, lim1)
    b1 = jax.random.uniform(kb1, (H,), jnp.float32, -lim1, lim1)
    w2 = jax.random.uniform(kw2, (H, D), jnp.float32, -lim2, lim2)
    b2 = jax.random.uniform(kb2, (D,), jnp.float32, -lim2, lim2)

    out = feed_forward(x, w1, b1, w2, b2)
    out = jax.block_until_ready(out)

    ref = _reference(x, w1, b1, w2, b2)
    assert out.shape == (B, S, D)
    assert jnp.allclose(out, ref, atol=1e-4, rtol=1e-4)

    print("KERNEL_OK")
</pallas_src>

<mosaic_0001>
module attributes {stable_mosaic.version = 11 : i64} {
  func.func @ffn_kernel(%arg0: i32, %arg1: i32, %arg2: memref<16x128xf32, #tpu.memory_space<vmem>>, %arg3: memref<128x128xf32, #tpu.memory_space<vmem>>, %arg4: memref<1x128xf32, #tpu.memory_space<vmem>>, %arg5: memref<128x128xf32, #tpu.memory_space<vmem>>, %arg6: memref<1x128xf32, #tpu.memory_space<vmem>>, %arg7: memref<16x128xf32, #tpu.memory_space<vmem>>, %arg8: memref<16x128xf32, #tpu.memory_space<vmem>>) attributes {dimension_semantics = [#tpu.dimension_semantics<parallel>, #tpu.dimension_semantics<arbitrary>], iteration_bounds = array<i64: 1, 1>, scalar_prefetch = 0 : i64, scratch_operands = 1 : i64, tpu.core_type = #tpu.core_type<tc>, window_params = [{transform_indices = @transform_0, window_bounds = array<i64: 16, 128>}, {transform_indices = @transform_1, window_bounds = array<i64: 128, 128>}, {transform_indices = @transform_2, window_bounds = array<i64: 1, 128>}, {transform_indices = @transform_3, window_bounds = array<i64: 128, 128>}, {pipeline_mode = #tpu.pipeline_mode<synchronous>, transform_indices = @transform_4, window_bounds = array<i64: 1, 128>}, {transform_indices = @transform_5, window_bounds = array<i64: 16, 128>}]} {
    %c0_i32 = arith.constant 0 : i32
    %0 = arith.cmpi eq, %arg1, %c0_i32 : i32
    %1 = arith.extui %0 : i1 to i32
    %c0_i32_0 = arith.constant 0 : i32
    %2 = arith.cmpi ne, %1, %c0_i32_0 : i32
    scf.if %2 {
      %cst_19 = arith.constant 0.000000e+00 : f32
      %30 = vector.broadcast %cst_19 : f32 to vector<16x128xf32>
      %c0_20 = arith.constant 0 : index
      %c0_21 = arith.constant 0 : index
      %31 = vector.load %arg8[%c0_20, %c0_21] : memref<16x128xf32, #tpu.memory_space<vmem>>, vector<16x128xf32>
      tpu.vector_store %arg8[%c0_20, %c0_21], %30 {strides = array<i32>} : memref<16x128xf32, #tpu.memory_space<vmem>>, vector<16x128xf32>,
    } else {
    }
    %c0 = arith.constant 0 : index
    %c0_1 = arith.constant 0 : index
    %3 = vector.load %arg2[%c0, %c0_1] : memref<16x128xf32, #tpu.memory_space<vmem>>, vector<16x128xf32>
    %c0_2 = arith.constant 0 : index
    %c0_3 = arith.constant 0 : index
    %4 = vector.load %arg3[%c0_2, %c0_3] : memref<128x128xf32, #tpu.memory_space<vmem>>, vector<128x128xf32>
    %cst = arith.constant dense<0.000000e+00> : vector<16x128xf32>
    %5 = tpu.matmul %3, %4, %cst {dimension_numbers = #tpu.dot_dimension_numbers<[1], [0], [0], [1], [0, 0, 1, 1], [], []>} : vector<16x128xf32>, vector<128x128xf32>, vector<16x128xf32> -> vector<16x128xf32>
    %c0_4 = arith.constant 0 : index
    %c0_5 = arith.constant 0 : index
    %6 = vector.load %arg4[%c0_4, %c0_5] : memref<1x128xf32, #tpu.memory_space<vmem>>, vector<1x128xf32>
    %7 = vector.broadcast %6 : vector<1x128xf32> to vector<16x128xf32>
    %8 = arith.addf %5, %7 : vector<16x128xf32>
    %cst_6 = arith.constant 5.000000e-01 : f32
    %9 = vector.broadcast %cst_6 : f32 to vector<16x128xf32>
    %10 = arith.mulf %9, %8 : vector<16x128xf32>
    %11 = arith.mulf %8, %8 : vector<16x128xf32>
    %12 = arith.mulf %11, %8 : vector<16x128xf32>
    %cst_7 = arith.constant 4.471500e-02 : f32
    %13 = vector.broadcast %cst_7 : f32 to vector<16x128xf32>
    %14 = arith.mulf %13, %12 : vector<16x128xf32>
    %15 = arith.addf %8, %14 : vector<16x128xf32>
    %cst_8 = arith.constant 0.797884583 : f32
    %16 = vector.broadcast %cst_8 : f32 to vector<16x128xf32>
    %17 = arith.mulf %16, %15 : vector<16x128xf32>
    %18 = math.tanh %17 : vector<16x128xf32>
    %cst_9 = arith.constant 1.000000e+00 : f32
    %19 = vector.broadcast %cst_9 : f32 to vector<16x128xf32>
    %20 = arith.addf %19, %18 : vector<16x128xf32>
    %21 = arith.mulf %10, %20 : vector<16x128xf32>
    %c0_10 = arith.constant 0 : index
    %c0_11 = arith.constant 0 : index
    %22 = vector.load %arg8[%c0_10, %c0_11] : memref<16x128xf32, #tpu.memory_space<vmem>>, vector<16x128xf32>
    %c0_12 = arith.constant 0 : index
    %c0_13 = arith.constant 0 : index
    %23 = vector.load %arg5[%c0_12, %c0_13] : memref<128x128xf32, #tpu.memory_space<vmem>>, vector<128x128xf32>
    %cst_14 = arith.constant dense<0.000000e+00> : vector<16x128xf32>
    %24 = tpu.matmul %21, %23, %cst_14 {dimension_numbers = #tpu.dot_dimension_numbers<[1], [0], [0], [1], [0, 0, 1, 1], [], []>} : vector<16x128xf32>, vector<128x128xf32>, vector<16x128xf32> -> vector<16x128xf32>
    %25 = arith.addf %22, %24 : vector<16x128xf32>
    %c0_15 = arith.constant 0 : index
    %c0_16 = arith.constant 0 : index
    %26 = vector.load %arg8[%c0_15, %c0_16] : memref<16x128xf32, #tpu.memory_space<vmem>>, vector<16x128xf32>
    tpu.vector_store %arg8[%c0_15, %c0_16], %25 {strides = array<i32>} : memref<16x128xf32, #tpu.memory_space<vmem>>, vector<16x128xf32>,
    %c0_i32_17 = arith.constant 0 : i32
    %27 = arith.cmpi eq, %arg1, %c0_i32_17 : i32
    %28 = arith.extui %27 : i1 to i32
    %c0_i32_18 = arith.constant 0 : i32
    %29 = arith.cmpi ne, %28, %c0_i32_18 : i32
    scf.if %29 {
      %c0_19 = arith.constant 0 : index
      %c0_20 = arith.constant 0 : index
      %30 = vector.load %arg8[%c0_19, %c0_20] : memref<16x128xf32, #tpu.memory_space<vmem>>, vector<16x128xf32>
      %c0_21 = arith.constant 0 : index
      %c0_22 = arith.constant 0 : index
      %31 = vector.load %arg6[%c0_21, %c0_22] : memref<1x128xf32, #tpu.memory_space<vmem>>, vector<1x128xf32>
      %32 = vector.broadcast %31 : vector<1x128xf32> to vector<16x128xf32>
      %33 = arith.addf %30, %32 : vector<16x128xf32>
      %c0_23 = arith.constant 0 : index
      %c0_24 = arith.constant 0 : index
      %34 = vector.load %arg7[%c0_23, %c0_24] : memref<16x128xf32, #tpu.memory_space<vmem>>, vector<16x128xf32>
      tpu.vector_store %arg7[%c0_23, %c0_24], %33 {strides = array<i32>} : memref<16x128xf32, #tpu.memory_space<vmem>>, vector<16x128xf32>,
    } else {
    }
    return
  }
  func.func @transform_0(%arg0: i32, %arg1: i32) -> (i32, i32) {
    %c0_i32 = arith.constant 0 : i32
    %c0_i32_0 = arith.constant 0 : i32
    return %arg0, %c0_i32 : i32, i32
  }
  func.func @transform_1(%arg0: i32, %arg1: i32) -> (i32, i32) {
    %c0_i32 = arith.constant 0 : i32
    %c0_i32_0 = arith.constant 0 : i32
    return %c0_i32, %arg1 : i32, i32
  }
  func.func @transform_2(%arg0: i32, %arg1: i32) -> (i32, i32) {
    %c0_i32 = arith.constant 0 : i32
    %c0_i32_0 = arith.constant 0 : i32
    return %c0_i32, %arg1 : i32, i32
  }
  func.func @transform_3(%arg0: i32, %arg1: i32) -> (i32, i32) {
    %c0_i32 = arith.constant 0 : i32
    %c0_i32_0 = arith.constant 0 : i32
    return %arg1, %c0_i32 : i32, i32
  }
  func.func @transform_4(%arg0: i32, %arg1: i32) -> (i32, i32) {
    %c0_i32 = arith.constant 0 : i32
    %c0_i32_0 = arith.constant 0 : i32
    %c0_i32_1 = arith.constant 0 : i32
    return %c0_i32, %c0_i32_0 : i32, i32
  }
  func.func @transform_5(%arg0: i32, %arg1: i32) -> (i32, i32) {
    %c0_i32 = arith.constant 0 : i32
    %c0_i32_0 = arith.constant 0 : i32
    return %arg0, %c0_i32 : i32, i32
  }
}

</mosaic_0001>

<llo_original>
// kernel: tpu_custom_call.1
$region0: #{tpu_custom_call.1}
  #allocation0 [shape = 'u32[]', space=smem, size = 0x4, offset = 0x4, fixed_abs, tag = 'smem constant byte address 0x4 - core index']
  #allocation1 [shape = 'u32[144,128]{1,0:T(1,128)}', space=vmem, size = 0x12000, scoped, tag = 'internal scratch']
  #allocation2 [shape = 'f32[16,128]{1,0:T(8,128)}', space=vmem, size = 0x2000, scoped, tag = 'scratch operand']
  %s0 = inlined_call_operand.hbm [shape: f32[16,128], index: 0, kind: input, shape index: {}]
  %s1 = inlined_call_operand.hbm [shape: f32[128,128], index: 1, kind: input, shape index: {}]
  %s2 = inlined_call_operand.vmem [shape: f32[1,128], index: 2, kind: input, shape index: {}]
  %s3 = inlined_call_operand.hbm [shape: f32[128,128], index: 3, kind: input, shape index: {}]
  %s4 = inlined_call_operand.vmem [shape: f32[1,128], index: 4, kind: input, shape index: {}]
  %s5 = inlined_call_operand.hbm [shape: f32[16,128], index: 5, kind: output, shape index: {}]
  %s6 = sld [smem:[#allocation0]]
  $region50: #{tpu_custom_call.1} parent=0
    _
  %s8 = ssub.s32 1, %s6
  %s9 = scalar_select 0, %s8, %s6
  $region1: #{tpu_custom_call.1} parent=0
    #allocation3 [shape = 'u8[8192]{0}', space=vmem, size = 0x2000, scoped, tag = 'input window, operand 0, single buffered']
    #allocation4 [shape = 's32[1]{0}', space=sflag, size = 0x4, scoped, tag = 'scoped memory for tpu_custom_call.1']
    #allocation5 [shape = 's32[1]{0}', space=sflag, size = 0x4, scoped, tag = 'scoped memory for tpu_custom_call.1']
    #allocation6 [shape = 'u8[65536]{0}', space=vmem, size = 0x10000, scoped, tag = 'input window, operand 1, single buffered']
    #allocation7 [shape = 's32[1]{0}', space=sflag, size = 0x4, scoped, tag = 'scoped memory for tpu_custom_call.1']
    #allocation8 [shape = 'u8[65536]{0}', space=vmem, size = 0x10000, scoped, tag = 'input window, operand 3, single buffered']
    #allocation9 [shape = 'u8[8192]{0}', space=vmem, size = 0x2000, scoped, tag = 'output window, operand 0, single buffered']
    %10 = vsyncpa [#allocation4], 0
    %11 = vsyncpa [#allocation7], 0
    %12 = vsyncpa [#allocation5], 0
    // Predicated region
    $region2: #{tpu_custom_call.1} parent=1 // pred_check
      _
    $region3: #{tpu_custom_call.1} parent=1 // pred_check_branch
      %14 = sbr.rel (0) target = $region5
    $region4: #{tpu_custom_call.1} parent=1 // pred_region
      %s16 = ssub.s32 256, 256
      %17 = vsyncadd [#allocation4], %s16
      %s18 = sshll.u32 [#allocation3], 4
      %s19 = int_to_ptr.vmem [resolvable:$true] %s18
      %24 = dma.hbm_to_vmem [thread:$0]  %s0, 256, %s19, [#allocation4], 128, 128, 8
    $region5: #{tpu_custom_call.1} parent=1 // pred_fallthru
      _
    // Predicated region
    $region6: #{tpu_custom_call.1} parent=1 // pred_check
      _
    $region7: #{tpu_custom_call.1} parent=1 // pred_check_branch
      %26 = sbr.rel (0) target = $region9
    $region8: #{tpu_custom_call.1} parent=1 // pred_region
      %s28 = ssub.s32 2048, 2048
      %29 = vsyncadd [#allocation7], %s28
      %s30 = sshll.u32 [#allocation6], 4
      %s31 = int_to_ptr.vmem [resolvable:$true] %s30
      %36 = dma.hbm_to_vmem [thread:$0]  %s1, 2048, %s31, [#allocation7], 128, 128, 8
    $region9: #{tpu_custom_call.1} parent=1 // pred_fallthru
      _
    // Predicated region
    $region10: #{tpu_custom_call.1} parent=1 // pred_check
      _
    $region11: #{tpu_custom_call.1} parent=1 // pred_check_branch
      %38 = sbr.rel (0) target = $region13
    $region12: #{tpu_custom_call.1} parent=1 // pred_region
      _
    $region13: #{tpu_custom_call.1} parent=1 // pred_fallthru
      _
    // Predicated region
    $region14: #{tpu_custom_call.1} parent=1 // pred_check
      _
    $region15: #{tpu_custom_call.1} parent=1 // pred_check_branch
      %40 = sbr.rel (0) target = $region17
    $region16: #{tpu_custom_call.1} parent=1 // pred_region
      %s42 = ssub.s32 2048, 2048
      %43 = vsyncadd [#allocation7], %s42
      %s44 = sshll.u32 [#allocation8], 4
      %s45 = int_to_ptr.vmem [resolvable:$true] %s44
      %50 = dma.hbm_to_vmem [thread:$0]  %s3, 2048, %s45, [#allocation7], 128, 128, 8
    $region17: #{tpu_custom_call.1} parent=1 // pred_fallthru
      _
    // Predicated region
    $region18: #{tpu_custom_call.1} parent=1 // pred_check
      _
    $region19: #{tpu_custom_call.1} parent=1 // pred_check_branch
      %52 = sbr.rel (0) target = $region21
    $region20: #{tpu_custom_call.1} parent=1 // pred_region
      _
    $region21: #{tpu_custom_call.1} parent=1 // pred_fallthru
      _
    // Predicated region
    $region22: #{tpu_custom_call.1} parent=1 // pred_check
      _
    $region23: #{tpu_custom_call.1} parent=1 // pred_check_branch
      %54 = sbr.rel (0) target = $region25
    $region24: #{tpu_custom_call.1} parent=1 // pred_region
      %55 = dma.done [#allocation4], 256
    $region25: #{tpu_custom_call.1} parent=1 // pred_fallthru
      _
    // Predicated region
    $region26: #{tpu_custom_call.1} parent=1 // pred_check
      _
    $region27: #{tpu_custom_call.1} parent=1 // pred_check_branch
      %57 = sbr.rel (0) target = $region29
    $region28: #{tpu_custom_call.1} parent=1 // pred_region
      %58 = dma.done [#allocation7], 2048
    $region29: #{tpu_custom_call.1} parent=1 // pred_fallthru
      _
    // Predicated region
    $region30: #{tpu_custom_call.1} parent=1 // pred_check
      _
    $region31: #{tpu_custom_call.1} parent=1 // pred_check_branch
      %60 = sbr.rel (0) target = $region33
    $region32: #{tpu_custom_call.1} parent=1 // pred_region
      %61 = dma.done [#allocation7], 2048
    $region33: #{tpu_custom_call.1} parent=1 // pred_fallthru
      _
    %p62 = scmp.eq.s32.totalorder 0, 0
    // Predicated region
    $region34: #{tpu_custom_call.1} parent=1 // pred_check
      %p63 = pneg %p62
    $region35: #{tpu_custom_call.1} parent=1 // pred_check_branch
      %65 = sbr.rel (%p63) target = $region37
    $region36: #{tpu_custom_call.1} parent=1 // pred_region
      %66 = vst [vmem:[#allocation2] sm:$0xff] 0.0
      %67 = vst [vmem:[#allocation2 + $0x8] sm:$0xff] 0.0
    $region37: #{tpu_custom_call.1} parent=1 // pred_fallthru
      _
    %v68 = vld [vmem:[#allocation3] sm:$0xff]
    %v69 = vld [vmem:[#allocation3 + $0x8] sm:$0xff]
    %v70 = vld [vmem:[#allocation6] sm:$0xff]
    %v71 = vld [vmem:[#allocation6 + $0x8] sm:$0xff]
    %v72 = vld [vmem:[#allocation6 + $0x10] sm:$0xff]
    %v73 = vld [vmem:[#allocation6 + $0x18] sm:$0xff]
    %v74 = vld [vmem:[#allocation6 + $0x20] sm:$0xff]
    %v75 = vld [vmem:[#allocation6 + $0x28] sm:$0xff]
    %v76 = vld [vmem:[#allocation6 + $0x30] sm:$0xff]
    %v77 = vld [vmem:[#allocation6 + $0x38] sm:$0xff]
    %v78 = vld [vmem:[#allocation6 + $0x40] sm:$0xff]
    %v79 = vld [vmem:[#allocation6 + $0x48] sm:$0xff]
    %v80 = vld [vmem:[#allocation6 + $0x50] sm:$0xff]
    %v81 = vld [vmem:[#allocation6 + $0x58] sm:$0xff]
    %v82 = vld [vmem:[#allocation6 + $0x60] sm:$0xff]
    %v83 = vld [vmem:[#allocation6 + $0x68] sm:$0xff]
    %v84 = vld [vmem:[#allocation6 + $0x70] sm:$0xff]
    %v85 = vld [vmem:[#allocation6 + $0x78] sm:$0xff]
    %v86 = vld [vmem:[%s2] sm:$0x1]
    %v88 = vlaneseq
    %v89 = vshrl.u32 %v88, 7
    %v90 = vsub.s32 0, %v89
    %v91 = vrot.slane %v86, %v90
    %93 = vmatprep.subr.mxu0 0.0
    %94 = vmatpush1.msra.mxu0 %v70
    %95 = vmatprep.subr.mxu0 0.0
    %96 = vmatpush1.msra.mxu0 %v71
    %97 = vmatprep.subr.mxu0 0.0
    %98 = vmatpush1.msra.mxu0 %v72
    %99 = vmatprep.subr.mxu0 0.0
    %100 = vmatpush1.msra.mxu0 %v73
    %101 = vmatprep.subr.mxu0 0.0
    %102 = vmatpush1.msra.mxu0 %v74
    %103 = vmatprep.subr.mxu0 0.0
    %104 = vmatpush1.msra.mxu0 %v75
    %105 = vmatprep.subr.mxu0 0.0
    %106 = vmatpush1.msra.mxu0 %v76
    %107 = vmatprep.subr.mxu0 0.0
    %108 = vmatpush1.msra.mxu0 %v77
    %109 = vmatprep.subr.mxu0 0.0
    %110 = vmatpush1.msra.mxu0 %v78
    %111 = vmatprep.subr.mxu0 0.0
    %112 = vmatpush1.msra.mxu0 %v79
    %113 = vmatprep.subr.mxu0 0.0
    %114 = vmatpush1.msra.mxu0 %v80
    %115 = vmatprep.subr.mxu0 0.0
    %116 = vmatpush1.msra.mxu0 %v81
    %117 = vmatprep.subr.mxu0 0.0
    %118 = vmatpush1.msra.mxu0 %v82
    %119 = vmatprep.subr.mxu0 0.0
    %120 = vmatpush1.msra.mxu0 %v83
    %121 = vmatprep.subr.mxu0 0.0
    %122 = vmatpush1.msra.mxu0 %v84
    %123 = vmatprep.subr.mxu0 0.0
    %124 = vmatpush1.msra.mxu0 %v85
    %125 = vmatprep.subr.mxu0 0.0
    %126 = vmatpush1.msra.mxu0 0.0
    %127 = vmatprep.subr.mxu0 0.0
    %128 = vmatpush1.msra.mxu0 0.0
    %129 = vmatprep.subr.mxu0 0.0
    %130 = vmatpush1.msra.mxu0 0.0
    %131 = vmatprep.subr.mxu0 0.0
    %132 = vmatpush1.msra.mxu0 0.0
    %133 = vmatprep.subr.mxu0 0.0
    %134 = vmatpush1.msra.mxu0 0.0
    %135 = vmatprep.subr.mxu0 0.0
    %136 = vmatpush1.msra.mxu0 0.0
    %137 = vmatprep.subr.mxu0 0.0
    %138 = vmatpush1.msra.mxu0 0.0
    %139 = vmatprep.subr.mxu0 0.0
    %140 = vmatpush1.msra.mxu0 0.0
    %141 = vmatprep.subr.mxu0 0.0
    %142 = vmatpush1.msra.mxu0 0.0
    %143 = vmatprep.subr.mxu0 0.0
    %144 = vmatpush1.msra.mxu0 0.0
    %145 = vmatprep.subr.mxu0 0.0
    %146 = vmatpush1.msra.mxu0 0.0
    %147 = vmatprep.subr.mxu0 0.0
    %148 = vmatpush1.msra.mxu0 0.0
    %149 = vmatprep.subr.mxu0 0.0
    %150 = vmatpush1.msra.mxu0 0.0
    %151 = vmatprep.subr.mxu0 0.0
    %152 = vmatpush1.msra.mxu0 0.0
    %153 = vmatprep.subr.mxu0 0.0
    %154 = vmatpush1.msra.mxu0 0.0
    %155 = vmatprep.subr.mxu0 0.0
    %156 = vmatpush1.msra.mxu0 0.0
    %157 = vmatprep.mubr.f32.mxu0 0.0
    %158 = vmatmul.mubr.f32.gmra.mrb[0].mxu0 %v68
    %v159 = vpop.f32.mrb[0].mxu0
    %v160 = vadd.f32 %v91, %v159
    %v161 = vpop.f32.mrb[0].mxu0
    %162 = vmatprep.mubr.f32.mxu0 0.0
    %163 = vmatmul.mubr.f32.gmra.mrb[0].mxu0 %v69
    %v164 = vpop.f32.mrb[0].mxu0
    %v165 = vadd.f32 %v91, %v164
    %v166 = vpop.f32.mrb[0].mxu0
    %167 = vdwg.mxu0
    %v168 = vmul.f32 %v160, 0.5
    %v169 = vmul.f32 %v165, 0.5
    %v170 = vmul.f32 %v160, %v160
    %v171 = vmul.f32 %v165, %v165
    %v172 = vmul.f32 %v170, %v160
    %v173 = vmul.f32 %v171, %v165
    %v174 = vmul.f32 %v172, 0.044715
    %v175 = vmul.f32 %v173, 0.044715
    %v176 = vadd.f32 %v160, %v174
    %v177 = vadd.f32 %v165, %v175
    %v178 = vmul.f32 %v176, 0.7978846
    %v179 = vmul.f32 %v177, 0.7978846
    %v180 = vtanh.pop %v178
    %v181 = vtanh.pop %v179
    %v182 = vadd.f32 %v180, 1.0
    %v183 = vadd.f32 %v181, 1.0
    %v184 = vmul.f32 %v168, %v182
    %v185 = vmul.f32 %v169, %v183
    %v186 = vld [vmem:[#allocation2] sm:$0xff]
    %v187 = vld [vmem:[#allocation2 + $0x8] sm:$0xff]
    %v188 = vld [vmem:[#allocation8] sm:$0xff]
    %v189 = vld [vmem:[#allocation8 + $0x8] sm:$0xff]
    %v190 = vld [vmem:[#allocation8 + $0x10] sm:$0xff]
    %v191 = vld [vmem:[#allocation8 + $0x18] sm:$0xff]
    %v192 = vld [vmem:[#allocation8 + $0x20] sm:$0xff]
    %v193 = vld [vmem:[#allocation8 + $0x28] sm:$0xff]
    %v194 = vld [vmem:[#allocation8 + $0x30] sm:$0xff]
    %v195 = vld [vmem:[#allocation8 + $0x38] sm:$0xff]
    %v196 = vld [vmem:[#allocation8 + $0x40] sm:$0xff]
    %v197 = vld [vmem:[#allocation8 + $0x48] sm:$0xff]
    %v198 = vld [vmem:[#allocation8 + $0x50] sm:$0xff]
    %v199 = vld [vmem:[#allocation8 + $0x58] sm:$0xff]
    %v200 = vld [vmem:[#allocation8 + $0x60] sm:$0xff]
    %v201 = vld [vmem:[#allocation8 + $0x68] sm:$0xff]
    %v202 = vld [vmem:[#allocation8 + $0x70] sm:$0xff]
    %v203 = vld [vmem:[#allocation8 + $0x78] sm:$0xff]
    %204 = vmatprep.subr.mxu0 0.0
    %205 = vmatpush1.msra.mxu0 %v188
    %206 = vmatprep.subr.mxu0 0.0
    %207 = vmatpush1.msra.mxu0 %v189
    %208 = vmatprep.subr.mxu0 0.0
    %209 = vmatpush1.msra.mxu0 %v190
    %210 = vmatprep.subr.mxu0 0.0
    %211 = vmatpush1.msra.mxu0 %v191
    %212 = vmatprep.subr.mxu0 0.0
    %213 = vmatpush1.msra.mxu0 %v192
    %214 = vmatprep.subr.mxu0 0.0
    %215 = vmatpush1.msra.mxu0 %v193
    %216 = vmatprep.subr.mxu0 0.0
    %217 = vmatpush1.msra.mxu0 %v194
    %218 = vmatprep.subr.mxu0 0.0
    %219 = vmatpush1.msra.mxu0 %v195
    %220 = vmatprep.subr.mxu0 0.0
    %221 = vmatpush1.msra.mxu0 %v196
    %222 = vmatprep.subr.mxu0 0.0
    %223 = vmatpush1.msra.mxu0 %v197
    %224 = vmatprep.subr.mxu0 0.0
    %225 = vmatpush1.msra.mxu0 %v198
    %226 = vmatprep.subr.mxu0 0.0
    %227 = vmatpush1.msra.mxu0 %v199
    %228 = vmatprep.subr.mxu0 0.0
    %229 = vmatpush1.msra.mxu0 %v200
    %230 = vmatprep.subr.mxu0 0.0
    %231 = vmatpush1.msra.mxu0 %v201
    %232 = vmatprep.subr.mxu0 0.0
    %233 = vmatpush1.msra.mxu0 %v202
    %234 = vmatprep.subr.mxu0 0.0
    %235 = vmatpush1.msra.mxu0 %v203
    %236 = vmatprep.subr.mxu0 0.0
    %237 = vmatpush1.msra.mxu0 0.0
    %238 = vmatprep.subr.mxu0 0.0
    %239 = vmatpush1.msra.mxu0 0.0
    %240 = vmatprep.subr.mxu0 0.0
    %241 = vmatpush1.msra.mxu0 0.0
    %242 = vmatprep.subr.mxu0 0.0
    %243 = vmatpush1.msra.mxu0 0.0
    %244 = vmatprep.subr.mxu0 0.0
    %245 = vmatpush1.msra.mxu0 0.0
    %246 = vmatprep.subr.mxu0 0.0
    %247 = vmatpush1.msra.mxu0 0.0
    %248 = vmatprep.subr.mxu0 0.0
    %249 = vmatpush1.msra.mxu0 0.0
    %250 = vmatprep.subr.mxu0 0.0
    %251 = vmatpush1.msra.mxu0 0.0
    %252 = vmatprep.subr.mxu0 0.0
    %253 = vmatpush1.msra.mxu0 0.0
    %254 = vmatprep.subr.mxu0 0.0
    %255 = vmatpush1.msra.mxu0 0.0
    %256 = vmatprep.subr.mxu0 0.0
    %257 = vmatpush1.msra.mxu0 0.0
    %258 = vmatprep.subr.mxu0 0.0
    %259 = vmatpush1.msra.mxu0 0.0
    %260 = vmatprep.subr.mxu0 0.0
    %261 = vmatpush1.msra.mxu0 0.0
    %262 = vmatprep.subr.mxu0 0.0
    %263 = vmatpush1.msra.mxu0 0.0
    %264 = vmatprep.subr.mxu0 0.0
    %265 = vmatpush1.msra.mxu0 0.0
    %266 = vmatprep.subr.mxu0 0.0
    %267 = vmatpush1.msra.mxu0 0.0
    %268 = vmatprep.mubr.f32.mxu0 0.0
    %269 = vmatmul.mubr.f32.gmra.mrb[0].mxu0 %v184
    %v270 = vpop.f32.mrb[0].mxu0
    %v271 = vadd.f32 0.0, %v270
    %v272 = vpop.f32.mrb[0].mxu0
    %273 = vmatprep.mubr.f32.mxu0 0.0
    %274 = vmatmul.mubr.f32.gmra.mrb[0].mxu0 %v185
    %v275 = vpop.f32.mrb[0].mxu0
    %v276 = vadd.f32 0.0, %v275
    %v277 = vpop.f32.mrb[0].mxu0
    %278 = vdwg.mxu0
    %v279 = vadd.f32 %v186, %v271
    %v280 = vadd.f32 %v187, %v276
    %281 = vst [vmem:[#allocation2] sm:$0xff] %v279
    %282 = vst [vmem:[#allocation2 + $0x8] sm:$0xff] %v280
    // Predicated region
    $region38: #{tpu_custom_call.1} parent=1 // pred_check
      %p283 = pneg %p62
    $region39: #{tpu_custom_call.1} parent=1 // pred_check_branch
      %285 = sbr.rel (%p283) target = $region41
    $region40: #{tpu_custom_call.1} parent=1 // pred_region
      %v286 = vld [vmem:[#allocation2] sm:$0xff]
      %v287 = vld [vmem:[#allocation2 + $0x8] sm:$0xff]
      %v288 = vld [vmem:[%s4] sm:$0x1]
      %v290 = vlaneseq
      %v291 = vshrl.u32 %v290, 7
      %v292 = vsub.s32 0, %v291
      %v293 = vrot.slane %v288, %v292
      %v295 = vadd.f32 %v286, %v293
      %v296 = vadd.f32 %v287, %v293
      %297 = vst [vmem:[#allocation9] sm:$0xff] %v295
      %298 = vst [vmem:[#allocation9 + $0x8] sm:$0xff] %v296
    $region41: #{tpu_custom_call.1} parent=1 // pred_fallthru
      _
    // Predicated region
    $region42: #{tpu_custom_call.1} parent=1 // pred_check
      _
    $region43: #{tpu_custom_call.1} parent=1 // pred_check_branch
      %300 = sbr.rel (0) target = $region45
    $region44: #{tpu_custom_call.1} parent=1 // pred_region
      %s302 = ssub.s32 256, 256
      %303 = vsyncadd [#allocation5], %s302
      %s304 = sshll.u32 [#allocation9], 4
      %s305 = int_to_ptr.vmem [resolvable:$true] %s304
      %310 = dma.vmem_to_hbm [thread:$0]  %s305, 256, %s5, [#allocation5], 128, 128, 8
    $region45: #{tpu_custom_call.1} parent=1 // pred_fallthru
      _
    // Predicated region
    $region46: #{tpu_custom_call.1} parent=1 // pred_check
      _
    $region47: #{tpu_custom_call.1} parent=1 // pred_check_branch
      %312 = sbr.rel (0) target = $region49
    $region48: #{tpu_custom_call.1} parent=1 // pred_region
      %313 = dma.done [#allocation5], 256
    $region49: #{tpu_custom_call.1} parent=1 // pred_fallthru
      _
    %314 = vsyncpa [#allocation4], 1
    %315 = vsyncpa [#allocation7], 1
    %316 = vsyncpa [#allocation5], 1

</llo_original>
